<compile_context>
chip_gen: v7x
topology: tpu7x:2x2x1
jax: 0.10.0
libtpu: 0.0.40
codegen_flags: <defaults>
</compile_context>

<pallas_src>
import functools
import math

import jax
import jax.numpy as jnp
from jax.experimental import pallas as pl
from jax.experimental.pallas import tpu as pltpu


def _round_up(n, m):
    return pl.cdiv(n, m) * m


def _pad_to(a, target_shape):
    pads = [(0, t - s) for s, t in zip(a.shape, target_shape)]
    if any(hi for _, hi in pads):
        a = jnp.pad(a, pads)
    return a


def _gelu(h, approx):
    if approx:
        # tanh GELU: transcendental goes to the EUP slot (co-issues with MXU/VALU).
        c = math.sqrt(2.0 / math.pi)
        return 0.5 * h * (1.0 + jnp.tanh(c * (h + 0.044715 * (h * h * h))))
    # Exact GELU (nn.GELU default): 0.5 * x * (1 + erf(x / sqrt(2))).
    return 0.5 * h * (1.0 + jax.lax.erf(h * (1.0 / math.sqrt(2.0))))


# ---------------------------------------------------------------------------
# Kernels
# ---------------------------------------------------------------------------

def mlp_resident_kernel(x_ref, w1_ref, b1_ref, w2_ref, b2_ref, o_ref, *,
                        gelu_approx, chunk):
    """Whole W1/W2 resident in VMEM; hidden dim processed in `chunk` slices."""
    tm, Ep = x_ref.shape
    Mp = w1_ref.shape[1]
    # Cast to the MXU compute dtype inside the kernel (no wrapper-side pass).
    x = x_ref[...].astype(w1_ref.dtype)

    acc = jnp.zeros((tm, Ep), jnp.float32)
    for c in range(Mp // chunk):                  # static (unrolled) chunk loop
        s = c * chunk
        h = jnp.dot(x, w1_ref[:, s:s + chunk],
                    preferred_element_type=jnp.float32) + b1_ref[:, s:s + chunk]
        h = _gelu(h, gelu_approx)
        # Dropout (eval mode): identity.
        acc = acc + jnp.dot(h.astype(w2_ref.dtype), w2_ref[s:s + chunk, :],
                            preferred_element_type=jnp.float32)
    # Dropout (eval mode): identity.
    o_ref[...] = (acc + b2_ref[...]).astype(o_ref.dtype)


def mlp_tiled_kernel(x_ref, w1_ref, b1_ref, w2_ref, b2_ref, o_ref, acc_ref, *,
                     gelu_approx):
    """Fallback for weights too large to stay resident (e.g. v7x 64 MiB/TC):
    W1/W2 hidden-dim tiles streamed over an 'arbitrary' grid axis."""
    k = pl.program_id(1)

    @pl.when(k == 0)
    def _init():
        acc_ref[...] = jnp.zeros_like(acc_ref)

    x = x_ref[...].astype(w1_ref.dtype)
    h = jnp.dot(x, w1_ref[...], preferred_element_type=jnp.float32) + b1_ref[...]
    h = _gelu(h, gelu_approx)
    # Dropout (eval mode): identity.
    acc_ref[...] += jnp.dot(h.astype(w2_ref.dtype), w2_ref[...],
                            preferred_element_type=jnp.float32)

    @pl.when(k == pl.num_programs(1) - 1)
    def _finalize():
        # Dropout (eval mode): identity.
        o_ref[...] = (acc_ref[...] + b2_ref[...]).astype(o_ref.dtype)


# ---------------------------------------------------------------------------
# Wrapper
# ---------------------------------------------------------------------------

def _tpu_vmem_and_two_tc():
    """Returns (per-core VMEM capacity bytes, chip has 2 TensorCores)."""
    kind = ""
    try:
        kind = jax.devices()[0].device_kind.lower()
    except Exception:
        pass
    two_tc = "v7" in kind
    try:
        vmem = int(pltpu.get_tpu_info().vmem_capacity_bytes)
    except Exception:
        # Conservative fallback: v7x per-TC capacity.
        vmem = (64 << 20) if (two_tc or not kind) else (128 << 20)
    return vmem, two_tc


def _row_tiling(n_rows, tm, two_tc):
    np_ = _round_up(n_rows, 8)
    tm = max(8, min(_round_up(tm, 8), np_))
    np_ = _round_up(np_, tm)
    nt = np_ // tm
    # Only pad to an even tile count where 2 TensorCores can split the grid.
    if two_tc and nt > 1 and nt % 2 == 1:
        nt += 1
        np_ = nt * tm
    return tm, np_, nt


def prepare_params(w1, b1, w2, b2, compute_dtype=jnp.bfloat16):
    """One-time weight prep (cast to MXU dtype + lane-pad) — hoisted out of the
    forward path so it is not re-done every call."""
    E, M = w1.shape
    Ep = _round_up(E, 128)
    Mp = _round_up(M, 128)
    cdt = jnp.dtype(compute_dtype)
    return {
        "w1": _pad_to(jnp.asarray(w1, cdt), (Ep, Mp)),
        "b1": _pad_to(jnp.asarray(b1, jnp.float32).reshape(1, M), (1, Mp)),
        "w2": _pad_to(jnp.asarray(w2, cdt), (Mp, Ep)),
        "b2": _pad_to(jnp.asarray(b2, jnp.float32).reshape(1, E), (1, Ep)),
        "E": E,
        "M": M,
    }


def mlp_forward(x, params, *, tm=None, gelu_approx=True, out_dtype=None,
                force_path=None):
    """x: (B, S, E) -> (B, S, E).

    gelu_approx=True (default fast path): tanh GELU approximation.
    gelu_approx=False: nn.GELU() exact erf semantics.
    out_dtype: optionally emit bf16 output to halve writeback traffic.
    force_path: None | "resident" | "tiled" (testing / override).
    """
    B, S, E = x.shape
    assert E == params["E"], "embedding size mismatch with prepared params"
    w1p, b1p, w2p, b2p = params["w1"], params["b1"], params["w2"], params["b2"]
    Ep, Mp = w1p.shape
    M = params["M"]
    cdt = jnp.dtype(w1p.dtype)
    out_dtype = jnp.dtype(x.dtype if out_dtype is None else out_dtype)
    x_isz = jnp.dtype(x.dtype).itemsize
    o_isz = out_dtype.itemsize
    N = B * S

    vmem_cap, two_tc = _tpu_vmem_and_two_tc()
    vmem_usable = vmem_cap - (6 << 20)       # headroom for Mosaic scratch / sems

    # Hidden-dim chunk for the resident kernel (largest divisor of Mp <= 512).
    chunk = max(c for c in (512, 384, 256, 128) if Mp % c == 0)
    # Hidden-dim tile for the streamed fallback (double-buffered W tiles <= ~24 MiB).
    tk_m = 128
    for c in (1024, 768, 512, 384, 256, 128):
        if Mp % c == 0 and 4 * Ep * c * cdt.itemsize <= (24 << 20):
            tk_m = c
            break

    w_bytes = 2 * Ep * Mp * cdt.itemsize + (Mp + Ep) * 4

    def resident_bytes(tm_):
        io = 2 * tm_ * Ep * (x_isz + o_isz)                       # 2x-buffered tiles
        mid = tm_ * chunk * 4 + tm_ * Ep * 4 + tm_ * Ep * cdt.itemsize
        return w_bytes + io + int(1.25 * mid)

    def tiled_bytes(tm_):
        w_t = 2 * (2 * Ep * tk_m) * cdt.itemsize + 2 * tk_m * 4 + Ep * 4
        io = 2 * tm_ * Ep * (x_isz + o_isz)
        mid = tm_ * tk_m * 4 + tm_ * Ep * cdt.itemsize
        return w_t + io + tm_ * Ep * 4 + int(1.25 * mid)

    # Row tile: 512 on 128-MiB-VMEM chips (v5e/v6e), 256 on v7x (64 MiB/TC).
    tm_req = tm if tm is not None else (512 if vmem_cap >= (100 << 20) else 256)

    sel = None
    if force_path != "tiled":
        for cand in (tm_req, 256, 128):
            if cand > tm_req:
                continue
            t_, np_, nt_ = _row_tiling(N, cand, two_tc)
            if force_path == "resident" or resident_bytes(t_) <= vmem_usable:
                sel = (t_, np_, nt_)
                break
    use_resident = sel is not None
    if not use_resident:
        sel = _row_tiling(N, min(tm_req, 256), two_tc)
    tm_eff, Np, num_tiles = sel

    # x: pad only if needed (cast to compute dtype happens inside the kernel).
    x2d = x.reshape(N, E)
    if (Np, Ep) != (N, E):
        x2d = _pad_to(x2d, (Np, Ep))

    cost = pl.CostEstimate(
        flops=int(4 * N * E * M),                    # two matmuls, 2*N*E*M each
        transcendentals=int(N * M),                  # GELU per hidden element
        bytes_accessed=int(N * E * (x_isz + o_isz)
                           + (1 if use_resident else num_tiles) * w_bytes),
    )

    if use_resident:
        need = resident_bytes(tm_eff)
        vmem_limit = int(min(vmem_cap - (4 << 20), need + (16 << 20)))
        out2d = pl.pallas_call(
            functools.partial(mlp_resident_kernel,
                              gelu_approx=gelu_approx, chunk=chunk),
            out_shape=jax.ShapeDtypeStruct((Np, Ep), out_dtype),
            grid_spec=pltpu.PrefetchScalarGridSpec(
                num_scalar_prefetch=0,
                grid=(num_tiles,),
                in_specs=[
                    pl.BlockSpec((tm_eff, Ep), lambda i: (i, 0)),        # x rows
                    pl.BlockSpec(memory_space=pltpu.MemorySpace.VMEM),   # W1 resident
                    pl.BlockSpec(memory_space=pltpu.MemorySpace.VMEM),   # b1 resident
                    pl.BlockSpec(memory_space=pltpu.MemorySpace.VMEM),   # W2 resident
                    pl.BlockSpec(memory_space=pltpu.MemorySpace.VMEM),   # b2 resident
                ],
                out_specs=pl.BlockSpec((tm_eff, Ep), lambda i: (i, 0)),
            ),
            compiler_params=pltpu.CompilerParams(
                dimension_semantics=("parallel",),
                vmem_limit_bytes=vmem_limit),
            cost_estimate=cost,
        )(x2d, w1p, b1p, w2p, b2p)
    else:
        need = tiled_bytes(tm_eff)
        vmem_limit = int(min(vmem_cap - (4 << 20), need + (16 << 20)))
        out2d = pl.pallas_call(
            functools.partial(mlp_tiled_kernel, gelu_approx=gelu_approx),
            out_shape=jax.ShapeDtypeStruct((Np, Ep), out_dtype),
            grid_spec=pltpu.PrefetchScalarGridSpec(
                num_scalar_prefetch=0,
                grid=(num_tiles, Mp // tk_m),
                in_specs=[
                    pl.BlockSpec((tm_eff, Ep), lambda i, k: (i, 0)),     # x rows
                    pl.BlockSpec((Ep, tk_m), lambda i, k: (0, k)),       # W1 tile
                    pl.BlockSpec((1, tk_m), lambda i, k: (0, k)),        # b1 tile
                    pl.BlockSpec((tk_m, Ep), lambda i, k: (k, 0)),       # W2 tile
                    pl.BlockSpec(memory_space=pltpu.MemorySpace.VMEM),   # b2 resident
                ],
                out_specs=pl.BlockSpec((tm_eff, Ep), lambda i, k: (i, 0)),
                scratch_shapes=[pltpu.VMEM((tm_eff, Ep), jnp.float32)],
            ),
            compiler_params=pltpu.CompilerParams(
                dimension_semantics=("parallel", "arbitrary"),
                vmem_limit_bytes=vmem_limit),
            cost_estimate=cost,
        )(x2d, w1p, b1p, w2p, b2p)

    return out2d[:N, :E].reshape(B, S, E)


def multilayer_perceptron(x, w1, b1, w2, b2, **kwargs):
    """Convenience wrapper (re-prepares weights per call; prefer
    prepare_params() + mlp_forward() to hoist the cast/pad out of the hot path)."""
    return mlp_forward(x, prepare_params(w1, b1, w2, b2), **kwargs)


# ---------------------------------------------------------------------------
# Reference + test
# ---------------------------------------------------------------------------

def init_params(key, embedding_size, mlp_size):
    """Deterministic init mimicking nn.Linear defaults (uniform +/- 1/sqrt(fan_in))."""
    k1, k2, k3, k4 = jax.random.split(key, 4)
    lim1 = 1.0 / math.sqrt(embedding_size)
    lim2 = 1.0 / math.sqrt(mlp_size)
    w1 = jax.random.uniform(k1, (embedding_size, mlp_size), jnp.float32, -lim1, lim1)
    b1 = jax.random.uniform(k2, (mlp_size,), jnp.float32, -lim1, lim1)
    w2 = jax.random.uniform(k3, (mlp_size, embedding_size), jnp.float32, -lim2, lim2)
    b2 = jax.random.uniform(k4, (embedding_size,), jnp.float32, -lim2, lim2)
    return w1, b1, w2, b2


def reference_mlp(x, w1, b1, w2, b2):
    h = jnp.dot(x, w1) + b1
    h = 0.5 * h * (1.0 + jax.lax.erf(h / jnp.sqrt(2.0)))   # exact GELU (nn.GELU)
    return jnp.dot(h, w2) + b2


if __name__ == "__main__":
    batch, seq, embedding_size, mlp_size = 2, 8, 32, 64

    key = jax.random.PRNGKey(0)
    kx, kp = jax.random.split(key)
    x = jax.random.normal(kx, (batch, seq, embedding_size), jnp.float32)
    w1, b1, w2, b2 = init_params(kp, embedding_size, mlp_size)

    params = prepare_params(w1, b1, w2, b2)     # one-time weight cast/pad
    ref = reference_mlp(x, w1, b1, w2, b2)

    # Default fast path: tanh GELU, resident-weight kernel.
    out = jax.block_until_ready(mlp_forward(x, params))
    assert out.shape == (batch, seq, embedding_size)
    assert jnp.allclose(out, ref, atol=5e-2, rtol=5e-2), "tanh-GELU path mismatch"

    # Exact-erf GELU (nn.GELU default semantics).
    out_exact = jax.block_until_ready(mlp_forward(x, params, gelu_approx=False))
    assert jnp.allclose(out_exact, ref, atol=5e-2, rtol=5e-2), "erf-GELU path mismatch"

    # Hidden-dim-tiled fallback (the path used when weights exceed per-core VMEM).
    out_tiled = jax.block_until_ready(mlp_forward(x, params, force_path="tiled"))
    assert jnp.allclose(out_tiled, ref, atol=5e-2, rtol=5e-2), "tiled path mismatch"

    print("KERNEL_OK")
</pallas_src>

<mosaic_0001>
module attributes {stable_mosaic.version = 11 : i64} {
  func.func @mlp_resident_kernel(%arg0: i32, %arg1: memref<16x128xf32, #tpu.memory_space<vmem>>, %arg2: memref<128x128xbf16, #tpu.memory_space<vmem>>, %arg3: memref<1x128xf32, #tpu.memory_space<vmem>>, %arg4: memref<128x128xbf16, #tpu.memory_space<vmem>>, %arg5: memref<1x128xf32, #tpu.memory_space<vmem>>, %arg6: memref<16x128xf32, #tpu.memory_space<vmem>>) attributes {dimension_semantics = [#tpu.dimension_semantics<parallel>], iteration_bounds = array<i64: 1>, scalar_prefetch = 0 : i64, scratch_operands = 0 : i64, tpu.core_type = #tpu.core_type<tc>, window_params = [{transform_indices = @transform_0, window_bounds = array<i64: 16, 128>}, {pipeline_mode = #tpu.pipeline_mode<synchronous>, transform_indices = @transform_1, window_bounds = array<i64: 128, 128>}, {pipeline_mode = #tpu.pipeline_mode<synchronous>, transform_indices = @transform_2, window_bounds = array<i64: 1, 128>}, {pipeline_mode = #tpu.pipeline_mode<synchronous>, transform_indices = @transform_3, window_bounds = array<i64: 128, 128>}, {pipeline_mode = #tpu.pipeline_mode<synchronous>, transform_indices = @transform_4, window_bounds = array<i64: 1, 128>}, {transform_indices = @transform_5, window_bounds = array<i64: 16, 128>}]} {
    %c0 = arith.constant 0 : index
    %c0_0 = arith.constant 0 : index
    %0 = vector.load %arg1[%c0, %c0_0] : memref<16x128xf32, #tpu.memory_space<vmem>>, vector<16x128xf32>
    %1 = arith.truncf %0 : vector<16x128xf32> to vector<16x128xbf16>
    %cst = arith.constant 0.000000e+00 : f32
    %2 = vector.broadcast %cst : f32 to vector<16x128xf32>
    %c0_1 = arith.constant 0 : index
    %c0_2 = arith.constant 0 : index
    %3 = vector.load %arg2[%c0_1, %c0_2] : memref<128x128xbf16, #tpu.memory_space<vmem>>, vector<128x128xbf16>
    %cst_3 = arith.constant dense<0.000000e+00> : vector<16x128xf32>
    %4 = tpu.matmul %1, %3, %cst_3 {dimension_numbers = #tpu.dot_dimension_numbers<[1], [0], [0], [1], [0, 0, 1, 1], [], []>} : vector<16x128xbf16>, vector<128x128xbf16>, vector<16x128xf32> -> vector<16x128xf32>
    %c0_4 = arith.constant 0 : index
    %c0_5 = arith.constant 0 : index
    %5 = vector.load %arg3[%c0_4, %c0_5] : memref<1x128xf32, #tpu.memory_space<vmem>>, vector<1x128xf32>
    %6 = vector.broadcast %5 : vector<1x128xf32> to vector<16x128xf32>
    %7 = arith.addf %4, %6 : vector<16x128xf32>
    %cst_6 = arith.constant 5.000000e-01 : f32
    %8 = vector.broadcast %cst_6 : f32 to vector<16x128xf32>
    %9 = arith.mulf %8, %7 : vector<16x128xf32>
    %10 = arith.mulf %7, %7 : vector<16x128xf32>
    %11 = arith.mulf %10, %7 : vector<16x128xf32>
    %cst_7 = arith.constant 4.471500e-02 : f32
    %12 = vector.broadcast %cst_7 : f32 to vector<16x128xf32>
    %13 = arith.mulf %12, %11 : vector<16x128xf32>
    %14 = arith.addf %7, %13 : vector<16x128xf32>
    %cst_8 = arith.constant 0.797884583 : f32
    %15 = vector.broadcast %cst_8 : f32 to vector<16x128xf32>
    %16 = arith.mulf %15, %14 : vector<16x128xf32>
    %17 = math.tanh %16 : vector<16x128xf32>
    %cst_9 = arith.constant 1.000000e+00 : f32
    %18 = vector.broadcast %cst_9 : f32 to vector<16x128xf32>
    %19 = arith.addf %18, %17 : vector<16x128xf32>
    %20 = arith.mulf %9, %19 : vector<16x128xf32>
    %21 = arith.truncf %20 : vector<16x128xf32> to vector<16x128xbf16>
    %c0_10 = arith.constant 0 : index
    %c0_11 = arith.constant 0 : index
    %22 = vector.load %arg4[%c0_10, %c0_11] : memref<128x128xbf16, #tpu.memory_space<vmem>>, vector<128x128xbf16>
    %cst_12 = arith.constant dense<0.000000e+00> : vector<16x128xf32>
    %23 = tpu.matmul %21, %22, %cst_12 {dimension_numbers = #tpu.dot_dimension_numbers<[1], [0], [0], [1], [0, 0, 1, 1], [], []>} : vector<16x128xbf16>, vector<128x128xbf16>, vector<16x128xf32> -> vector<16x128xf32>
    %24 = arith.addf %2, %23 : vector<16x128xf32>
    %c0_13 = arith.constant 0 : index
    %c0_14 = arith.constant 0 : index
    %25 = vector.load %arg5[%c0_13, %c0_14] : memref<1x128xf32, #tpu.memory_space<vmem>>, vector<1x128xf32>
    %26 = vector.broadcast %25 : vector<1x128xf32> to vector<16x128xf32>
    %27 = arith.addf %24, %26 : vector<16x128xf32>
    %c0_15 = arith.constant 0 : index
    %c0_16 = arith.constant 0 : index
    %28 = vector.load %arg6[%c0_15, %c0_16] : memref<16x128xf32, #tpu.memory_space<vmem>>, vector<16x128xf32>
    tpu.vector_store %arg6[%c0_15, %c0_16], %27 {strides = array<i32>} : memref<16x128xf32, #tpu.memory_space<vmem>>, vector<16x128xf32>,
    return
  }
  func.func @transform_0(%arg0: i32) -> (i32, i32) {
    %c0_i32 = arith.constant 0 : i32
    %c0_i32_0 = arith.constant 0 : i32
    return %arg0, %c0_i32 : i32, i32
  }
  func.func @transform_1(%arg0: i32) -> (i32, i32) {
    %c0_i32 = arith.constant 0 : i32
    %c0_i32_0 = arith.constant 0 : i32
    %c0_i32_1 = arith.constant 0 : i32
    return %c0_i32, %c0_i32_0 : i32, i32
  }
  func.func @transform_2(%arg0: i32) -> (i32, i32) {
    %c0_i32 = arith.constant 0 : i32
    %c0_i32_0 = arith.constant 0 : i32
    %c0_i32_1 = arith.constant 0 : i32
    return %c0_i32, %c0_i32_0 : i32, i32
  }
  func.func @transform_3(%arg0: i32) -> (i32, i32) {
    %c0_i32 = arith.constant 0 : i32
    %c0_i32_0 = arith.constant 0 : i32
    %c0_i32_1 = arith.constant 0 : i32
    return %c0_i32, %c0_i32_0 : i32, i32
  }
  func.func @transform_4(%arg0: i32) -> (i32, i32) {
    %c0_i32 = arith.constant 0 : i32
    %c0_i32_0 = arith.constant 0 : i32
    %c0_i32_1 = arith.constant 0 : i32
    return %c0_i32, %c0_i32_0 : i32, i32
  }
  func.func @transform_5(%arg0: i32) -> (i32, i32) {
    %c0_i32 = arith.constant 0 : i32
    %c0_i32_0 = arith.constant 0 : i32
    return %arg0, %c0_i32 : i32, i32
  }
}

</mosaic_0001>

<llo_original>
// kernel: tpu_custom_call.1
$region0: #{tpu_custom_call.1}
  #allocation0 [shape = 'u32[]', space=smem, size = 0x4, offset = 0x4, fixed_abs, tag = 'smem constant byte address 0x4 - core index']
  #allocation1 [shape = 'u32[144,128]{1,0:T(1,128)}', space=vmem, size = 0x12000, scoped, tag = 'internal scratch']
  %s0 = inlined_call_operand.hbm [shape: f32[16,128], index: 0, kind: input, shape index: {}]
  %s1 = inlined_call_operand.hbm [shape: bf16[128,128], index: 1, kind: input, shape index: {}]
  %s2 = inlined_call_operand.vmem [shape: f32[1,128], index: 2, kind: input, shape index: {}]
  %s3 = inlined_call_operand.hbm [shape: bf16[128,128], index: 3, kind: input, shape index: {}]
  %s4 = inlined_call_operand.vmem [shape: f32[1,128], index: 4, kind: input, shape index: {}]
  %s5 = inlined_call_operand.hbm [shape: f32[16,128], index: 5, kind: output, shape index: {}]
  %s6 = sld [smem:[#allocation0]]
  $region42: #{tpu_custom_call.1} parent=0
    _
  %s8 = ssub.s32 1, %s6
  %s9 = scalar_select 0, %s8, %s6
  $region1: #{tpu_custom_call.1} parent=0
    #allocation2 [shape = 'u8[8192]{0}', space=vmem, size = 0x2000, scoped, tag = 'input window, operand 0, single buffered']
    #allocation3 [shape = 's32[1]{0}', space=sflag, size = 0x4, scoped, tag = 'scoped memory for tpu_custom_call.1']
    #allocation4 [shape = 's32[1]{0}', space=sflag, size = 0x4, scoped, tag = 'scoped memory for tpu_custom_call.1']
    #allocation5 [shape = 'u8[32768]{0}', space=vmem, size = 0x8000, scoped, tag = 'input window, operand 1, single buffered']
    #allocation6 [shape = 's32[1]{0}', space=sflag, size = 0x4, scoped, tag = 'scoped memory for tpu_custom_call.1']
    #allocation7 [shape = 'u8[32768]{0}', space=vmem, size = 0x8000, scoped, tag = 'input window, operand 3, single buffered']
    #allocation8 [shape = 'u8[8192]{0}', space=vmem, size = 0x2000, scoped, tag = 'output window, operand 0, single buffered']
    %10 = vsyncpa [#allocation3], 0
    %11 = vsyncpa [#allocation6], 0
    %12 = vsyncpa [#allocation4], 0
    // Predicated region
    $region2: #{tpu_custom_call.1} parent=1 // pred_check
      _
    $region3: #{tpu_custom_call.1} parent=1 // pred_check_branch
      %14 = sbr.rel (0) target = $region5
    $region4: #{tpu_custom_call.1} parent=1 // pred_region
      %s16 = ssub.s32 256, 256
      %17 = vsyncadd [#allocation3], %s16
      %s18 = sshll.u32 [#allocation2], 4
      %s19 = int_to_ptr.vmem [resolvable:$true] %s18
      %24 = dma.hbm_to_vmem [thread:$0]  %s0, 256, %s19, [#allocation3], 128, 128, 8
    $region5: #{tpu_custom_call.1} parent=1 // pred_fallthru
      _
    // Predicated region
    $region6: #{tpu_custom_call.1} parent=1 // pred_check
      _
    $region7: #{tpu_custom_call.1} parent=1 // pred_check_branch
      %26 = sbr.rel (0) target = $region9
    $region8: #{tpu_custom_call.1} parent=1 // pred_region
      %s28 = ssub.s32 1024, 1024
      %29 = vsyncadd [#allocation6], %s28
      %s30 = sshll.u32 [#allocation5], 4
      %s31 = int_to_ptr.vmem [resolvable:$true] %s30
      %36 = dma.hbm_to_vmem [thread:$0]  %s1, 1024, %s31, [#allocation6], 64, 64, 4
    $region9: #{tpu_custom_call.1} parent=1 // pred_fallthru
      _
    // Predicated region
    $region10: #{tpu_custom_call.1} parent=1 // pred_check
      _
    $region11: #{tpu_custom_call.1} parent=1 // pred_check_branch
      %38 = sbr.rel (0) target = $region13
    $region12: #{tpu_custom_call.1} parent=1 // pred_region
      _
    $region13: #{tpu_custom_call.1} parent=1 // pred_fallthru
      _
    // Predicated region
    $region14: #{tpu_custom_call.1} parent=1 // pred_check
      _
    $region15: #{tpu_custom_call.1} parent=1 // pred_check_branch
      %40 = sbr.rel (0) target = $region17
    $region16: #{tpu_custom_call.1} parent=1 // pred_region
      %s42 = ssub.s32 1024, 1024
      %43 = vsyncadd [#allocation6], %s42
      %s44 = sshll.u32 [#allocation7], 4
      %s45 = int_to_ptr.vmem [resolvable:$true] %s44
      %50 = dma.hbm_to_vmem [thread:$0]  %s3, 1024, %s45, [#allocation6], 64, 64, 4
    $region17: #{tpu_custom_call.1} parent=1 // pred_fallthru
      _
    // Predicated region
    $region18: #{tpu_custom_call.1} parent=1 // pred_check
      _
    $region19: #{tpu_custom_call.1} parent=1 // pred_check_branch
      %52 = sbr.rel (0) target = $region21
    $region20: #{tpu_custom_call.1} parent=1 // pred_region
      _
    $region21: #{tpu_custom_call.1} parent=1 // pred_fallthru
      _
    // Predicated region
    $region22: #{tpu_custom_call.1} parent=1 // pred_check
      _
    $region23: #{tpu_custom_call.1} parent=1 // pred_check_branch
      %54 = sbr.rel (0) target = $region25
    $region24: #{tpu_custom_call.1} parent=1 // pred_region
      %55 = dma.done [#allocation3], 256
    $region25: #{tpu_custom_call.1} parent=1 // pred_fallthru
      _
    // Predicated region
    $region26: #{tpu_custom_call.1} parent=1 // pred_check
      _
    $region27: #{tpu_custom_call.1} parent=1 // pred_check_branch
      %57 = sbr.rel (0) target = $region29
    $region28: #{tpu_custom_call.1} parent=1 // pred_region
      %58 = dma.done [#allocation6], 1024
    $region29: #{tpu_custom_call.1} parent=1 // pred_fallthru
      _
    // Predicated region
    $region30: #{tpu_custom_call.1} parent=1 // pred_check
      _
    $region31: #{tpu_custom_call.1} parent=1 // pred_check_branch
      %60 = sbr.rel (0) target = $region33
    $region32: #{tpu_custom_call.1} parent=1 // pred_region
      %61 = dma.done [#allocation6], 1024
    $region33: #{tpu_custom_call.1} parent=1 // pred_fallthru
      _
    %v63 = vld [vmem:[#allocation2] sm:$0xff]
    %v64 = vld [vmem:[#allocation2 + $0x8] sm:$0xff]
    %v65 = vpack.c.bf16 %v64, %v63
    %v66 = vld [vmem:[#allocation5] sm:$0xf]
    %v67 = vld [vmem:[#allocation5 + $0x4] sm:$0xf]
    %v68 = vld [vmem:[#allocation5 + $0x8] sm:$0xf]
    %v69 = vld [vmem:[#allocation5 + $0xc] sm:$0xf]
    %v70 = vld [vmem:[#allocation5 + $0x10] sm:$0xf]
    %v71 = vld [vmem:[#allocation5 + $0x14] sm:$0xf]
    %v72 = vld [vmem:[#allocation5 + $0x18] sm:$0xf]
    %v73 = vld [vmem:[#allocation5 + $0x1c] sm:$0xf]
    %v74 = vld [vmem:[#allocation5 + $0x20] sm:$0xf]
    %v75 = vld [vmem:[#allocation5 + $0x24] sm:$0xf]
    %v76 = vld [vmem:[#allocation5 + $0x28] sm:$0xf]
    %v77 = vld [vmem:[#allocation5 + $0x2c] sm:$0xf]
    %v78 = vld [vmem:[#allocation5 + $0x30] sm:$0xf]
    %v79 = vld [vmem:[#allocation5 + $0x34] sm:$0xf]
    %v80 = vld [vmem:[#allocation5 + $0x38] sm:$0xf]
    %v81 = vld [vmem:[#allocation5 + $0x3c] sm:$0xf]
    %v82 = vld [vmem:[%s2] sm:$0x1]
    %v84 = vlaneseq
    %v85 = vshrl.u32 %v84, 7
    %v86 = vsub.s32 0, %v85
    %v87 = vrot.slane %v82, %v86
    %v105 = vunpack.c.l.b16 %v66
    %v106 = vunpack.c.l.b16 %v67
    %v107 = vunpack.c.l.b16 %v68
    %v108 = vunpack.c.l.b16 %v69
    %v109 = vunpack.c.l.b16 %v70
    %v110 = vunpack.c.l.b16 %v71
    %v111 = vunpack.c.l.b16 %v72
    %v112 = vunpack.c.l.b16 %v73
    %v113 = vunpack.c.l.b16 %v74
    %v114 = vunpack.c.l.b16 %v75
    %v115 = vunpack.c.l.b16 %v76
    %v116 = vunpack.c.l.b16 %v77
    %v117 = vunpack.c.l.b16 %v78
    %v118 = vunpack.c.l.b16 %v79
    %v119 = vunpack.c.l.b16 %v80
    %v120 = vunpack.c.l.b16 %v81
    %v121 = vpack.c.b16 %v106, %v105
    %v122 = vpack.c.b16 %v108, %v107
    %v123 = vpack.c.b16 %v110, %v109
    %v124 = vpack.c.b16 %v112, %v111
    %v125 = vpack.c.b16 %v114, %v113
    %v126 = vpack.c.b16 %v116, %v115
    %v127 = vpack.c.b16 %v118, %v117
    %v128 = vpack.c.b16 %v120, %v119
    %137 = vmatprep.subr.bf16.mxu0 0
    %138 = vmatpush1.bf16.msra.mxu0 %v121
    %139 = vmatprep.subr.bf16.mxu0 0
    %140 = vmatpush1.bf16.msra.mxu0 %v122
    %141 = vmatprep.subr.bf16.mxu0 0
    %142 = vmatpush1.bf16.msra.mxu0 %v123
    %143 = vmatprep.subr.bf16.mxu0 0
    %144 = vmatpush1.bf16.msra.mxu0 %v124
    %145 = vmatprep.subr.bf16.mxu0 0
    %146 = vmatpush1.bf16.msra.mxu0 %v125
    %147 = vmatprep.subr.bf16.mxu0 0
    %148 = vmatpush1.bf16.msra.mxu0 %v126
    %149 = vmatprep.subr.bf16.mxu0 0
    %150 = vmatpush1.bf16.msra.mxu0 %v127
    %151 = vmatprep.subr.bf16.mxu0 0
    %152 = vmatpush1.bf16.msra.mxu0 %v128
    %153 = vmatprep.subr.bf16.mxu0 0
    %154 = vmatpush1.bf16.msra.mxu0 0
    %155 = vmatprep.subr.bf16.mxu0 0
    %156 = vmatpush1.bf16.msra.mxu0 0
    %157 = vmatprep.subr.bf16.mxu0 0
    %158 = vmatpush1.bf16.msra.mxu0 0
    %159 = vmatprep.subr.bf16.mxu0 0
    %160 = vmatpush1.bf16.msra.mxu0 0
    %161 = vmatprep.subr.bf16.mxu0 0
    %162 = vmatpush1.bf16.msra.mxu0 0
    %163 = vmatprep.subr.bf16.mxu0 0
    %164 = vmatpush1.bf16.msra.mxu0 0
    %165 = vmatprep.subr.bf16.mxu0 0
    %166 = vmatpush1.bf16.msra.mxu0 0
    %167 = vmatprep.subr.bf16.mxu0 0
    %168 = vmatpush1.bf16.msra.mxu0 0
    %169 = vmatprep.mubr.bf16.mxu0 0
    %170 = vmatmul.mubr.bf16.gmra.mrb[0].mxu0 %v65
    %v171 = vpop.f32.mrb[0].mxu0
    %v172 = vadd.f32 %v87, %v171
    %v173 = vpop.f32.mrb[0].mxu0
    %v174 = vpop.f32.mrb[0].mxu0
    %v175 = vadd.f32 %v87, %v174
    %v176 = vpop.f32.mrb[0].mxu0
    %177 = vdwg.mxu0
    %v178 = vmul.f32 %v172, 0.5
    %v179 = vmul.f32 %v175, 0.5
    %v180 = vmul.f32 %v172, %v172
    %v181 = vmul.f32 %v175, %v175
    %v182 = vmul.f32 %v180, %v172
    %v183 = vmul.f32 %v181, %v175
    %v184 = vmul.f32 %v182, 0.044715
    %v185 = vmul.f32 %v183, 0.044715
    %v186 = vadd.f32 %v172, %v184
    %v187 = vadd.f32 %v175, %v185
    %v188 = vmul.f32 %v186, 0.7978846
    %v189 = vmul.f32 %v187, 0.7978846
    %v190 = vtanh.pop %v188
    %v191 = vtanh.pop %v189
    %v192 = vadd.f32 %v190, 1.0
    %v193 = vadd.f32 %v191, 1.0
    %v194 = vmul.f32 %v178, %v192
    %v195 = vmul.f32 %v179, %v193
    %v196 = vpack.c.bf16 %v195, %v194
    %v197 = vld [vmem:[#allocation7] sm:$0xf]
    %v198 = vld [vmem:[#allocation7 + $0x4] sm:$0xf]
    %v199 = vld [vmem:[#allocation7 + $0x8] sm:$0xf]
    %v200 = vld [vmem:[#allocation7 + $0xc] sm:$0xf]
    %v201 = vld [vmem:[#allocation7 + $0x10] sm:$0xf]
    %v202 = vld [vmem:[#allocation7 + $0x14] sm:$0xf]
    %v203 = vld [vmem:[#allocation7 + $0x18] sm:$0xf]
    %v204 = vld [vmem:[#allocation7 + $0x1c] sm:$0xf]
    %v205 = vld [vmem:[#allocation7 + $0x20] sm:$0xf]
    %v206 = vld [vmem:[#allocation7 + $0x24] sm:$0xf]
    %v207 = vld [vmem:[#allocation7 + $0x28] sm:$0xf]
    %v208 = vld [vmem:[#allocation7 + $0x2c] sm:$0xf]
    %v209 = vld [vmem:[#allocation7 + $0x30] sm:$0xf]
    %v210 = vld [vmem:[#allocation7 + $0x34] sm:$0xf]
    %v211 = vld [vmem:[#allocation7 + $0x38] sm:$0xf]
    %v212 = vld [vmem:[#allocation7 + $0x3c] sm:$0xf]
    %v213 = vld [vmem:[%s4] sm:$0x1]
    %v215 = vlaneseq
    %v216 = vshrl.u32 %v215, 7
    %v217 = vsub.s32 0, %v216
    %v218 = vrot.slane %v213, %v217
    %v236 = vunpack.c.l.b16 %v197
    %v237 = vunpack.c.l.b16 %v198
    %v238 = vunpack.c.l.b16 %v199
    %v239 = vunpack.c.l.b16 %v200
    %v240 = vunpack.c.l.b16 %v201
    %v241 = vunpack.c.l.b16 %v202
    %v242 = vunpack.c.l.b16 %v203
    %v243 = vunpack.c.l.b16 %v204
    %v244 = vunpack.c.l.b16 %v205
    %v245 = vunpack.c.l.b16 %v206
    %v246 = vunpack.c.l.b16 %v207
    %v247 = vunpack.c.l.b16 %v208
    %v248 = vunpack.c.l.b16 %v209
    %v249 = vunpack.c.l.b16 %v210
    %v250 = vunpack.c.l.b16 %v211
    %v251 = vunpack.c.l.b16 %v212
    %v252 = vpack.c.b16 %v237, %v236
    %v253 = vpack.c.b16 %v239, %v238
    %v254 = vpack.c.b16 %v241, %v240
    %v255 = vpack.c.b16 %v243, %v242
    %v256 = vpack.c.b16 %v245, %v244
    %v257 = vpack.c.b16 %v247, %v246
    %v258 = vpack.c.b16 %v249, %v248
    %v259 = vpack.c.b16 %v251, %v250
    %268 = vmatprep.subr.bf16.mxu0 0
    %269 = vmatpush1.bf16.msra.mxu0 %v252
    %270 = vmatprep.subr.bf16.mxu0 0
    %271 = vmatpush1.bf16.msra.mxu0 %v253
    %272 = vmatprep.subr.bf16.mxu0 0
    %273 = vmatpush1.bf16.msra.mxu0 %v254
    %274 = vmatprep.subr.bf16.mxu0 0
    %275 = vmatpush1.bf16.msra.mxu0 %v255
    %276 = vmatprep.subr.bf16.mxu0 0
    %277 = vmatpush1.bf16.msra.mxu0 %v256
    %278 = vmatprep.subr.bf16.mxu0 0
    %279 = vmatpush1.bf16.msra.mxu0 %v257
    %280 = vmatprep.subr.bf16.mxu0 0
    %281 = vmatpush1.bf16.msra.mxu0 %v258
    %282 = vmatprep.subr.bf16.mxu0 0
    %283 = vmatpush1.bf16.msra.mxu0 %v259
    %284 = vmatprep.subr.bf16.mxu0 0
    %285 = vmatpush1.bf16.msra.mxu0 0
    %286 = vmatprep.subr.bf16.mxu0 0
    %287 = vmatpush1.bf16.msra.mxu0 0
    %288 = vmatprep.subr.bf16.mxu0 0
    %289 = vmatpush1.bf16.msra.mxu0 0
    %290 = vmatprep.subr.bf16.mxu0 0
    %291 = vmatpush1.bf16.msra.mxu0 0
    %292 = vmatprep.subr.bf16.mxu0 0
    %293 = vmatpush1.bf16.msra.mxu0 0
    %294 = vmatprep.subr.bf16.mxu0 0
    %295 = vmatpush1.bf16.msra.mxu0 0
    %296 = vmatprep.subr.bf16.mxu0 0
    %297 = vmatpush1.bf16.msra.mxu0 0
    %298 = vmatprep.subr.bf16.mxu0 0
    %299 = vmatpush1.bf16.msra.mxu0 0
    %300 = vmatprep.mubr.bf16.mxu0 0
    %301 = vmatmul.mubr.bf16.gmra.mrb[0].mxu0 %v196
    %v302 = vpop.f32.mrb[0].mxu0
    %v303 = vadd.f32 %v218, %v302
    %v304 = vpop.f32.mrb[0].mxu0
    %v305 = vpop.f32.mrb[0].mxu0
    %v306 = vadd.f32 %v218, %v305
    %v307 = vpop.f32.mrb[0].mxu0
    %308 = vdwg.mxu0
    %309 = vst [vmem:[#allocation8] sm:$0xff] %v303
    %310 = vst [vmem:[#allocation8 + $0x8] sm:$0xff] %v306
    // Predicated region
    $region34: #{tpu_custom_call.1} parent=1 // pred_check
      _
    $region35: #{tpu_custom_call.1} parent=1 // pred_check_branch
      %312 = sbr.rel (0) target = $region37
    $region36: #{tpu_custom_call.1} parent=1 // pred_region
      %s314 = ssub.s32 256, 256
      %315 = vsyncadd [#allocation4], %s314
      %s316 = sshll.u32 [#allocation8], 4
      %s317 = int_to_ptr.vmem [resolvable:$true] %s316
      %322 = dma.vmem_to_hbm [thread:$0]  %s317, 256, %s5, [#allocation4], 128, 128, 8
    $region37: #{tpu_custom_call.1} parent=1 // pred_fallthru
      _
    // Predicated region
    $region38: #{tpu_custom_call.1} parent=1 // pred_check
      _
    $region39: #{tpu_custom_call.1} parent=1 // pred_check_branch
      %324 = sbr.rel (0) target = $region41
    $region40: #{tpu_custom_call.1} parent=1 // pred_region
      %325 = dma.done [#allocation4], 256
    $region41: #{tpu_custom_call.1} parent=1 // pred_fallthru
      _
    %326 = vsyncpa [#allocation3], 1
    %327 = vsyncpa [#allocation6], 1
    %328 = vsyncpa [#allocation4], 1

</llo_original>
